<compile_context>
chip_gen: v5e
topology: v5e:2x2
jax: 0.10.0
libtpu: 0.0.40
codegen_flags: <defaults>
</compile_context>

<pallas_src>
import functools
import math

import jax
import jax.numpy as jnp
from jax.experimental import pallas as pl
from jax.experimental.pallas import tpu as pltpu

_GOLDEN = 0x9E3779B9
_MIX = 0x85EBCA6B
_COLKEY = 0x68E31DA4

_BLOCK_BYTES = 2 << 20                  # ~2 MiB per input block
_VMEM_LIMIT_BYTES = 32 * 1024 * 1024    # explicit scoped-VMEM limit (safe on v5e/v6e/v7x)


def _hash_u32(x):
    """lowbias32 integer hash — good avalanche, a handful of VPU int ops."""
    x = x ^ (x >> jnp.uint32(16))
    x = x * jnp.uint32(0x7FEB352D)
    x = x ^ (x >> jnp.uint32(15))
    x = x * jnp.uint32(0x846CA68B)
    x = x ^ (x >> jnp.uint32(16))
    return x


def _dropout_kernel(seed_ref, x_ref, o_ref, *, mode, tile_rows, tile_cols,
                    n_cols, keep_threshold, scale):
    # Per-call key from the runtime seed (scalar math only).
    key = (seed_ref[0].astype(jnp.uint32) * jnp.uint32(_GOLDEN)
           + jnp.uint32(_MIX))

    r0 = pl.program_id(1).astype(jnp.uint32) * jnp.uint32(tile_rows)
    c0 = pl.program_id(2).astype(jnp.uint32) * jnp.uint32(tile_cols)
    thr = jnp.uint32(keep_threshold)

    if mode == "mid":
        # Mask shared across the broadcast (middle) axis: one value per
        # (pre, global col) pair — identical for every row/col tiling.
        cols = c0 + jax.lax.broadcasted_iota(jnp.uint32, (1, tile_cols), 1)
        idx = pl.program_id(0).astype(jnp.uint32) * jnp.uint32(n_cols) + cols
        keep = _hash_u32(idx ^ key) < thr
    elif mode == "last":
        # Mask shared across the last axis: one value per global row.
        rows = r0 + jax.lax.broadcasted_iota(jnp.uint32, (tile_rows, 1), 0)
        keep = _hash_u32(rows ^ key) < thr
    else:  # "none": independent mask per element.
        # Factored hash: avalanche the (rows,1) and (1,cols) index vectors
        # separately (cheap), then a single xor+mul+xorshift mix per element.
        # Depends only on the global (row, col) position -> tiling-invariant.
        rows = r0 + jax.lax.broadcasted_iota(jnp.uint32, (tile_rows, 1), 0)
        cols = c0 + jax.lax.broadcasted_iota(jnp.uint32, (1, tile_cols), 1)
        h_r = _hash_u32(rows ^ key)
        h_c = _hash_u32(cols ^ (key * jnp.uint32(_COLKEY) + jnp.uint32(1)))
        v = h_r ^ h_c
        v = v * jnp.uint32(_GOLDEN)
        v = v ^ (v >> jnp.uint32(16))
        keep = v < thr

    scale_c = jnp.asarray(scale, dtype=x_ref.dtype)
    o_ref[...] = jnp.where(keep, x_ref[...] * scale_c,
                           jnp.asarray(0, dtype=x_ref.dtype))


def _largest_dividing_multiple(n, unit, cap):
    """Largest multiple of `unit` that divides `n` and is <= cap (or None)."""
    cand = (min(cap, n) // unit) * unit
    while cand >= unit:
        if n % cand == 0:
            return cand
        cand -= unit
    return None


def _pick_tiles(mid, n_cols, itemsize):
    """Tile sizes targeting ~_BLOCK_BYTES per input block.

    Columns are tiled too, so the minimum 8-row block can never exceed the
    scoped-VMEM budget regardless of the trailing-dim product.
    """
    budget = _BLOCK_BYTES

    # -- columns -----------------------------------------------------------
    min_rows = min(mid, 8)
    if n_cols <= 128 or n_cols * itemsize * min_rows <= budget:
        tile_cols = n_cols                              # full, lane-dense width
    else:
        cap = max(128, budget // (min_rows * itemsize))
        tile_cols = _largest_dividing_multiple(n_cols, 128, cap)
        if tile_cols is None:                           # ragged last column tile
            tile_cols = max(128, (cap // 128) * 128)

    # -- rows --------------------------------------------------------------
    target_rows = min(4096, max(1, budget // max(1, tile_cols * itemsize)))
    if target_rows >= mid:
        tile_rows = mid
    else:
        tile_rows = _largest_dividing_multiple(mid, 8, target_rows)
        if tile_rows is None:                           # at most one ragged tile
            tile_rows = max(8, (target_rows // 8) * 8)
    return tile_rows, tile_cols


def _ensure_multicore_grid(pre, mid, n_cols, tile_rows, tile_cols):
    """Guarantee >= 2 parallel grid steps so both v7x TensorCores get work."""
    steps = pre * pl.cdiv(mid, tile_rows) * pl.cdiv(n_cols, tile_cols)
    if steps >= 2:
        return tile_rows, tile_cols
    if mid >= 16:
        half = max(8, ((mid // 2 + 7) // 8) * 8)
        if half < mid:
            return half, tile_cols
    if tile_cols >= 256 and tile_cols % 256 == 0:
        return tile_rows, tile_cols // 2
    return tile_rows, tile_cols


def dropout_forward(x, seed, *, broadcast_dim=None, p_drop=0.15, training=True):
    """Functional equivalent of Dropout(broadcast_dim, p_drop).forward(x)."""
    if not training or float(p_drop) <= 0.0:
        return x

    shape = x.shape
    ndim = x.ndim

    if broadcast_dim is None:
        mode = "none"
        n = x.size
        # Lane-dense flattening: largest divisor of x.size that is a multiple
        # of 128 (searched up to 16384) keeps every store unmasked.  The mask
        # depends only on the flattened (row, col) position, so this is
        # semantics-preserving.
        n_cols = None
        max_cand = min(16384, (n // 128) * 128)
        for cand in range(max_cand, 127, -128):
            if n % cand == 0:
                n_cols = cand
                break
        if n_cols is None:
            n_cols = int(shape[-1])      # fallback: masked stores, still correct
        pre, mid = 1, n // n_cols
    else:
        bd = broadcast_dim % ndim
        if bd == ndim - 1:
            # TODO(synk): fold small (<128) trailing dims into the lane axis in
            # "last" mode so the stores stay unmasked.
            mode = "last"
            pre = 1
            mid = int(math.prod(shape[:-1]))
            n_cols = int(shape[-1])
        else:
            mode = "mid"
            pre = int(math.prod(shape[:bd]))
            mid = int(shape[bd])
            n_cols = int(math.prod(shape[bd + 1:]))

    x3 = x.reshape(pre, mid, n_cols)
    tile_rows, tile_cols = _pick_tiles(mid, n_cols, x.dtype.itemsize)
    tile_rows, tile_cols = _ensure_multicore_grid(pre, mid, n_cols,
                                                  tile_rows, tile_cols)
    grid = (pre, pl.cdiv(mid, tile_rows), pl.cdiv(n_cols, tile_cols))

    # Keep probability as an integer threshold on the raw 32-bit hash.
    keep_threshold = min(int(round((1.0 - float(p_drop)) * 4294967296.0)),
                         0xFFFFFFFF)
    scale = 1.0 / (1.0 - float(p_drop))

    kernel = functools.partial(
        _dropout_kernel, mode=mode, tile_rows=tile_rows, tile_cols=tile_cols,
        n_cols=n_cols, keep_threshold=keep_threshold, scale=scale)

    seed_arr = jnp.asarray([seed], dtype=jnp.int32)

    out3 = pl.pallas_call(
        kernel,
        out_shape=jax.ShapeDtypeStruct((pre, mid, n_cols), x.dtype),
        grid=grid,
        in_specs=[
            pl.BlockSpec(memory_space=pltpu.MemorySpace.SMEM),     # seed scalar
            pl.BlockSpec((None, tile_rows, tile_cols),
                         lambda p, r, c: (p, r, c)),
        ],
        out_specs=pl.BlockSpec((None, tile_rows, tile_cols),
                               lambda p, r, c: (p, r, c)),
        input_output_aliases={1: 0},     # reuse x's HBM buffer when it is dead
        compiler_params=pltpu.CompilerParams(
            dimension_semantics=("parallel", "parallel", "parallel"),
            vmem_limit_bytes=_VMEM_LIMIT_BYTES),
        cost_estimate=pl.CostEstimate(
            flops=2 * x.size,
            transcendentals=0,
            bytes_accessed=2 * x.size * x.dtype.itemsize),
    )(seed_arr, x3)

    return out3.reshape(shape)


if __name__ == "__main__":
    key = jax.random.PRNGKey(0)
    B, L, D = 2, 16, 128
    p_drop = 0.15

    x = jax.random.normal(key, (B, L, D), dtype=jnp.float32)
    scaled = x / (1.0 - p_drop)

    # --- broadcast_dim=1: one mask shared across the sequence axis ---------
    out = dropout_forward(x, seed=1234, broadcast_dim=1, p_drop=p_drop,
                          training=True)
    out = jax.block_until_ready(out)

    kept = jnp.abs(out) > 0
    assert bool(jnp.all(jnp.where(kept, jnp.isclose(out, scaled, atol=1e-5),
                                  out == 0.0))), "dropout values incorrect"
    assert bool(jnp.all(kept == kept[:, :1, :])), "broadcast_dim mask not shared"
    keep_rate = float(jnp.mean(kept[:, 0, :].astype(jnp.float32)))
    assert 0.6 < keep_rate < 1.0, f"suspicious keep rate {keep_rate}"

    # --- broadcast_dim=None: independent per-element mask ------------------
    out_full = dropout_forward(x, seed=7, broadcast_dim=None, p_drop=p_drop,
                               training=True)
    out_full = jax.block_until_ready(out_full)
    kept_full = jnp.abs(out_full) > 0
    assert bool(jnp.all(jnp.where(kept_full,
                                  jnp.isclose(out_full, scaled, atol=1e-5),
                                  out_full == 0.0))), "elementwise dropout incorrect"
    keep_rate_full = float(jnp.mean(kept_full.astype(jnp.float32)))
    assert 0.65 < keep_rate_full < 0.97, f"suspicious keep rate {keep_rate_full}"

    # --- broadcast_dim=-1 (last axis): one mask value per row --------------
    out_last = dropout_forward(x, seed=3, broadcast_dim=-1, p_drop=p_drop,
                               training=True)
    out_last = jax.block_until_ready(out_last)
    kept_last = jnp.abs(out_last) > 0
    assert bool(jnp.all(jnp.where(kept_last,
                                  jnp.isclose(out_last, scaled, atol=1e-5),
                                  out_last == 0.0))), "last-dim dropout incorrect"
    assert bool(jnp.all(kept_last == kept_last[..., :1])), "last-dim mask not shared"
    keep_rate_last = float(jnp.mean(kept_last[..., 0].astype(jnp.float32)))
    assert 0.4 <= keep_rate_last <= 1.0, f"suspicious keep rate {keep_rate_last}"

    # --- eval mode is the identity ------------------------------------------
    out_eval = dropout_forward(x, seed=1234, broadcast_dim=1, p_drop=p_drop,
                               training=False)
    assert bool(jnp.all(out_eval == x))

    print("KERNEL_OK")
</pallas_src>

<mosaic_0001>
module attributes {stable_mosaic.version = 11 : i64} {
  func.func @_dropout_kernel(%arg0: i32, %arg1: i32, %arg2: i32, %arg3: memref<1xi32, #tpu.memory_space<smem>>, %arg4: memref<1x16x128xf32, #tpu.memory_space<vmem>>, %arg5: memref<1x16x128xf32, #tpu.memory_space<vmem>>) attributes {dimension_semantics = [#tpu.dimension_semantics<parallel>, #tpu.dimension_semantics<parallel>, #tpu.dimension_semantics<parallel>], iteration_bounds = array<i64: 2, 1, 1>, scalar_prefetch = 0 : i64, scratch_operands = 0 : i64, tpu.core_type = #tpu.core_type<tc>, window_params = [{transform_indices = @transform_0, window_bounds = array<i64: 1>}, {transform_indices = @transform_1, window_bounds = array<i64: 1, 16, 128>}, {transform_indices = @transform_2, window_bounds = array<i64: 1, 16, 128>}]} {
    %c0 = arith.constant 0 : index
    %0 = memref.load %arg3[%c0] : memref<1xi32, #tpu.memory_space<smem>>
    %c-1640531527_i32 = arith.constant -1640531527 : i32
    %1 = arith.muli %0, %c-1640531527_i32 : i32
    %c-2048144789_i32 = arith.constant -2048144789 : i32
    %2 = arith.addi %1, %c-2048144789_i32 : i32
    %c128_i32 = arith.constant 128 : i32
    %3 = arith.muli %arg2, %c128_i32 : i32
    %4 = tpu.iota {dimensions = array<i32: 1>} : vector<1x128xi32>
    %5 = vector.broadcast %3 : i32 to vector<1x128xi32>
    %6 = arith.addi %5, %4 : vector<1x128xi32>
    %c128_i32_0 = arith.constant 128 : i32
    %7 = arith.muli %arg0, %c128_i32_0 : i32
    %8 = vector.broadcast %7 : i32 to vector<1x128xi32>
    %9 = arith.addi %8, %6 : vector<1x128xi32>
    %10 = vector.broadcast %2 : i32 to vector<1x128xi32>
    %11 = arith.xori %9, %10 : vector<1x128xi32>
    %c16_i32 = arith.constant 16 : i32
    %12 = vector.broadcast %c16_i32 : i32 to vector<1x128xi32>
    %13 = arith.shrui %11, %12 : vector<1x128xi32>
    %14 = arith.xori %11, %13 : vector<1x128xi32>
    %c2146121005_i32 = arith.constant 2146121005 : i32
    %15 = vector.broadcast %c2146121005_i32 : i32 to vector<1x128xi32>
    %16 = arith.muli %14, %15 : vector<1x128xi32>
    %c15_i32 = arith.constant 15 : i32
    %17 = vector.broadcast %c15_i32 : i32 to vector<1x128xi32>
    %18 = arith.shrui %16, %17 : vector<1x128xi32>
    %19 = arith.xori %16, %18 : vector<1x128xi32>
    %c-2073254261_i32 = arith.constant -2073254261 : i32
    %20 = vector.broadcast %c-2073254261_i32 : i32 to vector<1x128xi32>
    %21 = arith.muli %19, %20 : vector<1x128xi32>
    %c16_i32_1 = arith.constant 16 : i32
    %22 = vector.broadcast %c16_i32_1 : i32 to vector<1x128xi32>
    %23 = arith.shrui %21, %22 : vector<1x128xi32>
    %24 = arith.xori %21, %23 : vector<1x128xi32>
    %c-644245094_i32 = arith.constant -644245094 : i32
    %25 = vector.broadcast %c-644245094_i32 : i32 to vector<1x128xi32>
    %26 = arith.cmpi ult, %24, %25 : vector<1x128xi32>
    %c0_2 = arith.constant 0 : index
    %c0_3 = arith.constant 0 : index
    %c0_4 = arith.constant 0 : index
    %27 = vector.load %arg4[%c0_2, %c0_3, %c0_4] : memref<1x16x128xf32, #tpu.memory_space<vmem>>, vector<1x16x128xf32>
    %28 = vector.shape_cast %27 : vector<1x16x128xf32> to vector<16x128xf32>
    %cst = arith.constant 1.17647064 : f32
    %29 = vector.broadcast %cst : f32 to vector<16x128xf32>
    %30 = arith.mulf %28, %29 : vector<16x128xf32>
    %cst_5 = arith.constant 0.000000e+00 : f32
    %31 = vector.shape_cast %26 : vector<1x128xi1> to vector<1x128xi1>
    %32 = vector.broadcast %31 : vector<1x128xi1> to vector<16x128xi1>
    %33 = vector.broadcast %cst_5 : f32 to vector<16x128xf32>
    %34 = arith.select %32, %30, %33 : vector<16x128xi1>, vector<16x128xf32>
    %c0_6 = arith.constant 0 : index
    %c0_7 = arith.constant 0 : index
    %c0_8 = arith.constant 0 : index
    %35 = vector.load %arg5[%c0_6, %c0_7, %c0_8] : memref<1x16x128xf32, #tpu.memory_space<vmem>>, vector<1x16x128xf32>
    %36 = vector.shape_cast %35 : vector<1x16x128xf32> to vector<16x128xf32>
    %37 = vector.shape_cast %34 : vector<16x128xf32> to vector<1x16x128xf32>
    tpu.vector_store %arg5[%c0_6, %c0_7, %c0_8], %37 {strides = array<i32>} : memref<1x16x128xf32, #tpu.memory_space<vmem>>, vector<1x16x128xf32>,
    return
  }
  func.func @transform_0(%arg0: i32, %arg1: i32, %arg2: i32) -> i32 {
    %c0_i32 = arith.constant 0 : i32
    %c0_i32_0 = arith.constant 0 : i32
    return %c0_i32 : i32
  }
  func.func @transform_1(%arg0: i32, %arg1: i32, %arg2: i32) -> (i32, i32, i32) {
    %c0_i32 = arith.constant 0 : i32
    return %arg0, %arg1, %arg2 : i32, i32, i32
  }
  func.func @transform_2(%arg0: i32, %arg1: i32, %arg2: i32) -> (i32, i32, i32) {
    %c0_i32 = arith.constant 0 : i32
    return %arg0, %arg1, %arg2 : i32, i32, i32
  }
}

</mosaic_0001>

<llo_original>
// kernel: tpu_custom_call.1
$region0: #{tpu_custom_call.1}
  #allocation0 [shape = 'u32[]', space=smem, size = 0x4, offset = 0x4, fixed_abs, tag = 'smem constant byte address 0x4 - core index']
  #allocation1 [shape = 'u32[72,128]{1,0:T(1,128)}', space=vmem, size = 0x9000, scoped, tag = 'internal scratch']
  #allocation2 [shape = 's32[1]{0:T(128)S(6)}', space=smem, size = 0x200, scoped, tag = 'scoped memory for tpu_custom_call.1']
  %s0 = inlined_call_operand.<no memory space> [shape: s32[1], index: 0, kind: input, shape index: {}]
  %s1 = inlined_call_operand.hbm [shape: f32[2,16,128], index: 1, kind: input, shape index: {}, may-alias: {1,2}]
  %s2 = inlined_call_operand.hbm [shape: f32[2,16,128], index: 2, kind: output, shape index: {}, may-alias: {1,2}]
  %s3 = sld [smem:[#allocation0]]
  $region45: #{tpu_custom_call.1} parent=0
    _
  %s5 = ssub.s32 1, %s3
  %s6 = scalar_select 0, %s5, %s3
  %7 = sst [smem:[#allocation2]] %s0
  $region1: #{tpu_custom_call.1} parent=0
    #allocation3 [shape = 'u8[16384]{0}', space=vmem, size = 0x4000, scoped, tag = 'input window, operand 1']
    #allocation4 [shape = 's32[2]{0}', space=sflag, size = 0x8, scoped, tag = 'scoped memory for tpu_custom_call.1']
    #allocation5 [shape = 's32[2]{0}', space=sflag, size = 0x8, scoped, tag = 'scoped memory for tpu_custom_call.1']
    #allocation6 [shape = 'u8[16384]{0}', space=vmem, size = 0x4000, scoped, tag = 'output window, operand 0']
    %8 = vsyncpa [#allocation4], 0
    %s9 = scalar_lea.sflag [#allocation4], 1
    %10 = vsyncpa %s9, 0
    %11 = vsyncpa [#allocation5], 0
    %s12 = scalar_lea.sflag [#allocation5], 1
    %13 = vsyncpa %s12, 0
    loop: start=0, step=1, limit=4
    $region2: #{tpu_custom_call.1} parent=1 // loop_pre_header
      _
    $region3: #{tpu_custom_call.1} parent=1 // loop_header
      %s15 = sphi 0, %s19
      %p16 = scmp.ge.s32.totalorder %s15, 4
      %s22 = sphi 0, %s41
      %s23 = sphi 0, %s37
      %s24 = sphi 0, %s33
      %s25 = sphi 0, %s22
      %s26 = sphi 0, %s23
      %s27 = sphi 0, %s24
      %s28 = sphi 0, %s25
      %s29 = sphi 0, %s26
      %s30 = sphi 0, %s27
      %s42 = sphi 0, %s42
      %s44 = sphi 0, %s42
      %s45 = sphi 0, %s44
      %s59 = sphi 0, %s45
      %s69 = sphi 0, %s71
      %s72 = sphi 0, %s69
      %s73 = sphi 0, %s72
      %s89 = sphi 0, %s73
      %s99 = sphi 0, %s101
      %s102 = sphi 0, %s99
      %s103 = sphi 0, %s102
      %s119 = sphi 0, %s103
    $region4: #{tpu_custom_call.1} parent=1 // loop_header_branch
      %18 = sbr.rel (%p16) target = $region8
    $region5: #{tpu_custom_call.1} parent=1 // loop_body
      %s20 = ssub.s32 %s15, 1
      %s21 = ssub.s32 %s15, 2
      %s31 = sadd.s32 1, %s24
      %p32 = scmp.ge.s32.totalorder %s31, 1
      %s33 = scalar_select %p32, 0, %s31
      %s34 = sadd.s32 1, %s23
      %s35 = scalar_select %p32, %s34, %s23
      %p36 = scmp.ge.s32.totalorder %s35, 1
      %s37 = scalar_select %p36, 0, %s35
      %s38 = sadd.s32 1, %s22
      %s39 = scalar_select %p36, %s38, %s22
      %p40 = scmp.ge.s32.totalorder %s39, 2
      %s41 = scalar_select %p40, 0, %s39
      %s43 = sadd.s32 %s42, 1
      %p46 = scmp.eq.s32.totalorder %s15, 1
      %p47 = scmp.ne.s32.totalorder %s42, %s44
      %p48 = scmp.eq.s32.totalorder %s15, 0
      %p49 = por %p47, %p48
      %p50 = scmp.ne.s32.totalorder %s42, %s44
      %p51 = scmp.eq.s32.totalorder %s20, 1
      %p52 = por %p50, %p51
      %p53 = scmp.ne.s32.totalorder %s44, %s45
      %p54 = scmp.eq.s32.totalorder %s20, 0
      %p55 = por %p53, %p54
      %p56 = scmp.ne.s32.totalorder %s44, %s45
      %p57 = scmp.eq.s32.totalorder %s21, 1
      %p58 = por %p56, %p57
      %p60 = scmp.ne.s32.totalorder %s45, %s59
      %p61 = scmp.eq.s32.totalorder %s21, 0
      %p62 = por %p60, %p61
      %s63 = ssub.s32 %s22, %s41
      %s64 = ssub.s32 %s23, %s37
      %s65 = sor.u32 %s63, %s64
      %s66 = ssub.s32 %s24, %s33
      %s67 = sor.u32 %s65, %s66
      %p68 = scmp.eq.s32.totalorder %s67, 0
      %s70 = sadd.s32 %s69, 1
      %s71 = scalar_select %p68, %s69, %s70
      %p74 = pneg %p68
      %p75 = scmp.eq.s32.totalorder %s15, 1
      %p76 = por %p74, %p75
      %p77 = scmp.ne.s32.totalorder %s69, %s72
      %p78 = scmp.eq.s32.totalorder %s15, 0
      %p79 = por %p77, %p78
      %p80 = scmp.ne.s32.totalorder %s69, %s72
      %p81 = scmp.eq.s32.totalorder %s20, 1
      %p82 = por %p80, %p81
      %p83 = scmp.ne.s32.totalorder %s72, %s73
      %p84 = scmp.eq.s32.totalorder %s20, 0
      %p85 = por %p83, %p84
      %p86 = scmp.ne.s32.totalorder %s72, %s73
      %p87 = scmp.eq.s32.totalorder %s21, 1
      %p88 = por %p86, %p87
      %p90 = scmp.ne.s32.totalorder %s73, %s89
      %p91 = scmp.eq.s32.totalorder %s21, 0
      %p92 = por %p90, %p91
      %s93 = ssub.s32 %s22, %s41
      %s94 = ssub.s32 %s23, %s37
      %s95 = sor.u32 %s93, %s94
      %s96 = ssub.s32 %s24, %s33
      %s97 = sor.u32 %s95, %s96
      %p98 = scmp.eq.s32.totalorder %s97, 0
      %s100 = sadd.s32 %s99, 1
      %s101 = scalar_select %p98, %s99, %s100
      %p104 = pneg %p98
      %p105 = scmp.eq.s32.totalorder %s15, 1
      %p106 = por %p104, %p105
      %p107 = scmp.ne.s32.totalorder %s99, %s102
      %p108 = scmp.eq.s32.totalorder %s15, 0
      %p109 = por %p107, %p108
      %p110 = scmp.ne.s32.totalorder %s99, %s102
      %p111 = scmp.eq.s32.totalorder %s20, 1
      %p112 = por %p110, %p111
      %p113 = scmp.ne.s32.totalorder %s102, %s103
      %p114 = scmp.eq.s32.totalorder %s20, 0
      %p115 = por %p113, %p114
      %p116 = scmp.ne.s32.totalorder %s102, %s103
      %p117 = scmp.eq.s32.totalorder %s21, 1
      %p118 = por %p116, %p117
      %p120 = scmp.ne.s32.totalorder %s103, %s119
      %p121 = scmp.eq.s32.totalorder %s21, 0
      %p122 = por %p120, %p121
      %p123 = scmp.le.s32.totalorder 1, %s15
      %p124 = scmp.lt.s32.totalorder %s15, 3
      %p125 = pnand %p123, %p124
      %p126 = pneg %p125
      // Predicated region
      $region9: #{tpu_custom_call.1} parent=5 // pred_check
        _
      $region10: #{tpu_custom_call.1} parent=5 // pred_check_branch
        %128 = sbr.rel (%p125) target = $region12
      $region11: #{tpu_custom_call.1} parent=5 // pred_region
        %s129 = ssub.s32 %s15, 1
        // Predicated region
        $region13: #{tpu_custom_call.1} parent=11 // pred_check
          %p130 = pneg %p55
        $region14: #{tpu_custom_call.1} parent=11 // pred_check_branch
          %132 = sbr.rel (%p130) target = $region16
        $region15: #{tpu_custom_call.1} parent=11 // pred_region
          _
        $region16: #{tpu_custom_call.1} parent=11 // pred_fallthru
          _
      $region12: #{tpu_custom_call.1} parent=5 // pred_fallthru
        _
      %p133 = scmp.lt.s32.totalorder %s15, 2
      // Predicated region
      $region17: #{tpu_custom_call.1} parent=5 // pred_check
        %p134 = pneg %p133
      $region18: #{tpu_custom_call.1} parent=5 // pred_check_branch
        %136 = sbr.rel (%p134) target = $region20
      $region19: #{tpu_custom_call.1} parent=5 // pred_region
        // Predicated region
        $region21: #{tpu_custom_call.1} parent=19 // pred_check
          %p137 = pneg %p79
        $region22: #{tpu_custom_call.1} parent=19 // pred_check_branch
          %139 = sbr.rel (%p137) target = $region24
        $region23: #{tpu_custom_call.1} parent=19 // pred_region
          %s140 = sand.u32 %s69, 1
          %s141 = scalar_lea.sflag [#allocation4], %s140
          %s142 = sand.u32 %s69, 1
          %s143 = smul.addr %s142, 16
          %s144 = scalar_lea.vmem [#allocation3], %s143
          %s145 = smul.u32 2, %s23
          %147 = vsyncadd %s141, 0
          %s148 = sadd.s32 %s24, %s145
          %s149 = smul.addr %s22, 2
          %s150 = sadd.s32 %s148, %s149
          %s151 = smul.addr %s150, 8
          %s152 = scalar_lea.hbm %s1, %s151
          %s153 = sshll.u32 %s152, 4
          %s154 = int_to_ptr.hbm [resolvable:$true] %s153
          %s155 = sshll.u32 %s144, 4
          %s156 = int_to_ptr.vmem [resolvable:$true] %s155
          %161 = dma.hbm_to_vmem [thread:$0]  %s154, 256, %s156, %s141, 128, 128, 8
        $region24: #{tpu_custom_call.1} parent=19 // pred_fallthru
          _
      $region20: #{tpu_custom_call.1} parent=5 // pred_fallthru
        _
      %p162 = scmp.le.s32.totalorder 1, %s15
      %p163 = scmp.lt.s32.totalorder %s15, 3
      %p164 = pnand %p162, %p163
      %p165 = pneg %p164
      // Predicated region
      $region25: #{tpu_custom_call.1} parent=5 // pred_check
        _
      $region26: #{tpu_custom_call.1} parent=5 // pred_check_branch
        %167 = sbr.rel (%p164) target = $region28
      $region27: #{tpu_custom_call.1} parent=5 // pred_region
        %s168 = ssub.s32 %s15, 1
        %s169 = sand.u32 %s72, 1
        %s170 = scalar_lea.sflag [#allocation4], %s169
        %s171 = sand.u32 %s72, 1
        %s172 = smul.addr %s171, 16
        %s173 = scalar_lea.vmem [#allocation3], %s172
        // Predicated region
        $region29: #{tpu_custom_call.1} parent=27 // pred_check
          %p174 = pneg %p85
        $region30: #{tpu_custom_call.1} parent=27 // pred_check_branch
          %176 = sbr.rel (%p174) target = $region32
        $region31: #{tpu_custom_call.1} parent=27 // pred_region
          %178 = dma.done %s170, 256
        $region32: #{tpu_custom_call.1} parent=27 // pred_fallthru
          _
        %p179 = pneg %p55
        %p180 = pneg %p52
        %s181 = sand.u32 %s72, 1
        %s182 = scalar_lea.sflag [#allocation4], %s181
        %s183 = sand.u32 %s72, 1
        %s184 = smul.addr %s183, 16
        %s185 = scalar_lea.vmem [#allocation3], %s184
        %p186 = pneg %p85
        %p187 = pneg %p82
        %p188 = pneg %p115
        %p189 = pneg %p112
        %s190 = sand.u32 %s102, 1
        %s191 = scalar_lea.sflag [#allocation5], %s190
        %s192 = sand.u32 %s102, 1
        %s193 = smul.addr %s192, 16
        %s194 = scalar_lea.vmem [#allocation6], %s193
        %s195 = smul.u32 2, %s26
        %s196 = smul.u32 2, %s26
        %s197 = sld [smem:[#allocation2]]
        %s198 = smul.u32 %s197, 2654435769
        %s199 = sadd.s32 %s198, 2246822507
        %s200 = smul.u32 %s27, 128
        %v201 = vlaneseq
        %v202 = vand.u32 %v201, 127
        %v203 = vstv %s200
        %v204 = vadd.s32 %v203, %v202
        %s205 = smul.u32 %s25, 128
        %v206 = vstv %s205
        %v207 = vadd.s32 %v206, %v204
        %v208 = vstv %s199
        %v209 = vxor.u32 %v207, %v208
        %v210 = vshrl.u32 %v209, 16
        %v211 = vxor.u32 %v209, %v210
        %v212 = vmul.u32 %v211, 2146121005
        %v213 = vshrl.u32 %v212, 15
        %v214 = vxor.u32 %v212, %v213
        %v215 = vmul.u32 %v214, 2221713035
        %v216 = vshrl.u32 %v215, 16
        %v217 = vxor.u32 %v215, %v216
        %v218 = vadd.s32 %v217, 2147483648
        %vm220 = vcmp.lt.s32.totalorder %v218, 1503238554
        %v221 = vld [vmem:[%s173] sm:$0xff]
        %v222 = vld [vmem:[%s173 + $0x8] sm:$0xff]
        %v223 = vmul.f32 %v221, 1.1764706
        %v224 = vmul.f32 %v222, 1.1764706
        %v225 = vsel %vm220, 1, 0
        %vm226 = vcmp.eq.s32.totalorder %v225, 1
        %v227 = vsel %vm226, %v223, 0.0
        %v228 = vsel %vm226, %v224, 0.0
        %229 = vst [vmem:[%s194] sm:$0xff] %v227
        %230 = vst [vmem:[%s194 + $0x8] sm:$0xff] %v228
        %s231 = sand.u32 %s102, 1
        %s232 = scalar_lea.sflag [#allocation5], %s231
        %s233 = sand.u32 %s102, 1
        %s234 = smul.addr %s233, 16
        %s235 = scalar_lea.vmem [#allocation6], %s234
        // Predicated region
        $region33: #{tpu_custom_call.1} parent=27 // pred_check
          %p236 = pneg %p112
        $region34: #{tpu_custom_call.1} parent=27 // pred_check_branch
          %238 = sbr.rel (%p236) target = $region36
        $region35: #{tpu_custom_call.1} parent=27 // pred_region
          %s239 = smul.u32 2, %s26
          %241 = vsyncadd %s232, 0
          %s242 = sadd.s32 %s27, %s239
          %s243 = smul.addr %s25, 2
          %s244 = sadd.s32 %s242, %s243
          %s245 = smul.addr %s244, 8
          %s246 = scalar_lea.hbm %s2, %s245
          %s247 = sshll.u32 %s235, 4
          %s248 = int_to_ptr.vmem [resolvable:$true] %s247
          %s249 = sshll.u32 %s246, 4
          %s250 = int_to_ptr.hbm [resolvable:$true] %s249
          %255 = dma.vmem_to_hbm [thread:$0]  %s248, 256, %s250, %s232, 128, 128, 8
        $region36: #{tpu_custom_call.1} parent=27 // pred_fallthru
          _
      $region28: #{tpu_custom_call.1} parent=5 // pred_fallthru
        _
      %p256 = scmp.le.s32.totalorder 2, %s15
      // Predicated region
      $region37: #{tpu_custom_call.1} parent=5 // pred_check
        %p257 = pneg %p256
      $region38: #{tpu_custom_call.1} parent=5 // pred_check_branch
        %259 = sbr.rel (%p257) target = $region40
      $region39: #{tpu_custom_call.1} parent=5 // pred_region
        %s260 = ssub.s32 %s15, 2
        // Predicated region
        $region41: #{tpu_custom_call.1} parent=39 // pred_check
          %p261 = pneg %p118
        $region42: #{tpu_custom_call.1} parent=39 // pred_check_branch
          %263 = sbr.rel (%p261) target = $region44
        $region43: #{tpu_custom_call.1} parent=39 // pred_region
          %s264 = sand.u32 %s103, 1
          %s265 = scalar_lea.sflag [#allocation5], %s264
          %s266 = sand.u32 %s103, 1
          %s267 = smul.addr %s266, 16
          %s268 = scalar_lea.vmem [#allocation6], %s267
          %270 = dma.done %s265, 256
        $region44: #{tpu_custom_call.1} parent=39 // pred_fallthru
          _
      $region40: #{tpu_custom_call.1} parent=5 // pred_fallthru
        _
    $region6: #{tpu_custom_call.1} parent=1 // loop_footer
      %s19 = sadd.s32 1, %s15
    $region7: #{tpu_custom_call.1} parent=1 // loop_footer_branch
      %14 = sbr.rel target = $region3
    $region8: #{tpu_custom_call.1} parent=1 // loop_exit
      _
    %271 = vsyncpa [#allocation4], 1
    %s272 = scalar_lea.sflag [#allocation4], 1
    %273 = vsyncpa %s272, 1
    %274 = vsyncpa [#allocation5], 1
    %s275 = scalar_lea.sflag [#allocation5], 1
    %276 = vsyncpa %s275, 1

</llo_original>
